<compile_context>
chip_gen: v6e
topology: v6e:2x2x1
jax: 0.10.0
libtpu: 0.0.40
codegen_flags: <defaults>
</compile_context>

<pallas_src>
import functools

import jax
import jax.numpy as jnp
from jax import lax
from jax.experimental import pallas as pl
from jax.experimental.pallas import tpu as pltpu

GAMMA = 2.0  # statically 2 -> focal weight is a plain square, no pow/exp-log.


def _make_focal_kernel(n_actual: int, tn: int, needs_row_mask: bool):
    """Builds the tiled focal-loss kernel for static (n_actual, tn)."""

    def kernel(out_ref, tgt_ref, loss_ref, acc_ref):
        p = pl.program_id(0)
        t = pl.program_id(1)
        num_t = pl.num_programs(1)

        @pl.when(t == 0)
        def _():
            acc_ref[...] = jnp.zeros_like(acc_ref)

        logits = out_ref[...].astype(jnp.float32)          # (TN, C)
        tgt = tgt_ref[...]                                  # (TN, 1) int32
        tn_, c = logits.shape

        # Gather logit of the target class via a select-reduce (no dynamic
        # gather on TPU); where() avoids a second (TN,C) f32 temp and 0*inf.
        col = lax.broadcasted_iota(jnp.int32, (tn_, c), 1)
        out_target = jnp.sum(jnp.where(col == tgt, logits, 0.0),
                             axis=-1, keepdims=True)        # (TN, 1)

        # sigmoid(target logit) -> focal weight (1 - p)^2 (single VPU mul).
        # approx=False keeps full precision vs. the f32 reference.
        probs = pl.reciprocal(1.0 + jnp.exp(-out_target), approx=False)
        w = 1.0 - probs
        focal_weight = w * w                                # (TN, 1)

        # cross_entropy (reduction='none'): logsumexp(logits) - logit_target
        m = jnp.max(logits, axis=-1, keepdims=True)         # (TN, 1)
        lse = m + jnp.log(jnp.sum(jnp.exp(logits - m), axis=-1, keepdims=True))
        ce_loss = lse - out_target                          # (TN, 1)

        row_loss = focal_weight * ce_loss                   # (TN, 1)

        if needs_row_mask:
            # Zero out contributions from padded rows (batch padded up to
            # P * T * TN rows in the wrapper).
            row = lax.broadcasted_iota(jnp.int32, (tn_, 1), 0)
            global_row = (p * num_t + t) * tn + row
            row_loss = jnp.where(global_row < n_actual, row_loss, 0.0)

        acc_ref[...] += jnp.sum(row_loss)

        @pl.when(t == num_t - 1)
        def _():
            # Lane-dense (1,128) store of this core's partial sum.
            loss_ref[...] = jnp.broadcast_to(acc_ref[...], loss_ref.shape)

    return kernel


@functools.partial(jax.jit, static_argnames=())
def _sum_partials(partials, p_cores):
    return jnp.sum(partials.reshape(p_cores, 128)[:, 0])


def focal_loss(output, target):
    """output: (N, C) float logits (f32 or bf16); target: (N,) int class ids."""
    n, c = output.shape
    itemsize = jnp.dtype(output.dtype).itemsize

    # --- Tile sizing: ~4 MiB of logits per tile, multiple of 8 sublanes,
    #     never larger than the (8-rounded) batch.
    target_bytes = 4 * 1024 * 1024
    tn = max(8, min(512, target_bytes // max(1, c * itemsize)))
    n_rounded = ((n + 7) // 8) * 8
    tn = min(tn, n_rounded)
    tn = max(8, (tn // 8) * 8)

    num_tiles = pl.cdiv(n, tn)
    # Leading 'parallel' axis: lets v7x's 2 TensorCores split the row tiles.
    p_cores = 2 if num_tiles >= 2 else 1
    t_per_core = pl.cdiv(num_tiles, p_cores)
    n_pad = p_cores * t_per_core * tn

    tgt2d = target.astype(jnp.int32).reshape(n, 1)
    out_in = output
    if n_pad != n:
        out_in = jnp.pad(output, ((0, n_pad - n), (0, 0)))
        tgt2d = jnp.pad(tgt2d, ((0, n_pad - n), (0, 0)))

    kernel = _make_focal_kernel(n, tn, needs_row_mask=(n_pad != n))

    # TODO(synk): if C < 128 in the deployed shape, fold rows into the lane
    # dim (or tile C for vocab-scale classes) for lane-dense loads; kept
    # simple here since the class dim equals the full array dim.
    partials = pl.pallas_call(
        kernel,
        out_shape=jax.ShapeDtypeStruct((1, p_cores * 128), jnp.float32),
        grid_spec=pltpu.PrefetchScalarGridSpec(
            num_scalar_prefetch=0,
            grid=(p_cores, t_per_core),
            in_specs=[
                pl.BlockSpec((tn, c), lambda p, t: (p * t_per_core + t, 0)),
                pl.BlockSpec((tn, 1), lambda p, t: (p * t_per_core + t, 0)),
            ],
            out_specs=pl.BlockSpec((1, 128), lambda p, t: (0, p)),
            scratch_shapes=[pltpu.VMEM((1, 1), jnp.float32)],
        ),
        compiler_params=pltpu.CompilerParams(
            dimension_semantics=("parallel", "arbitrary"),
        ),
    )(out_in, tgt2d)

    return jnp.sum(partials.reshape(p_cores, 128)[:, 0])


def focal_loss_ref(output, target):
    # Pure-JAX reference for correctness checking.
    n = output.shape[0]
    out_target = output[jnp.arange(n), target]
    probs = jax.nn.sigmoid(out_target)
    focal_weight = (1.0 - probs) ** GAMMA
    logp = jax.nn.log_softmax(output.astype(jnp.float32), axis=-1)
    ce = -logp[jnp.arange(n), target]
    return jnp.sum(focal_weight * ce)


if __name__ == "__main__":
    key = jax.random.PRNGKey(0)

    # Case 1: small shape consistent with the module (single tile path).
    k1, k2, k3, k4 = jax.random.split(key, 4)
    N1, C1 = 8, 16
    out1 = jax.random.normal(k1, (N1, C1), dtype=jnp.float32)
    tgt1 = jax.random.randint(k2, (N1,), 0, C1, dtype=jnp.int32)
    loss1 = jax.block_until_ready(focal_loss(out1, tgt1))
    ref1 = focal_loss_ref(out1, tgt1)
    assert jnp.allclose(loss1, ref1, rtol=1e-5, atol=1e-5), (loss1, ref1)

    # Case 2: exercises the tiled / 2-way-parallel / row-padded path.
    N2, C2 = 600, 16
    out2 = jax.random.normal(k3, (N2, C2), dtype=jnp.float32)
    tgt2 = jax.random.randint(k4, (N2,), 0, C2, dtype=jnp.int32)
    loss2 = jax.block_until_ready(focal_loss(out2, tgt2))
    ref2 = focal_loss_ref(out2, tgt2)
    assert jnp.allclose(loss2, ref2, rtol=1e-5, atol=1e-4), (loss2, ref2)

    print("KERNEL_OK")
</pallas_src>

<mosaic_0001>
module attributes {stable_mosaic.version = 11 : i64} {
  func.func @kernel(%arg0: i32, %arg1: i32, %arg2: memref<8x16xf32, #tpu.memory_space<vmem>>, %arg3: memref<8x1xi32, #tpu.memory_space<vmem>>, %arg4: memref<1x128xf32, #tpu.memory_space<vmem>>, %arg5: memref<1x1xf32, #tpu.memory_space<vmem>>) attributes {dimension_semantics = [#tpu.dimension_semantics<parallel>, #tpu.dimension_semantics<arbitrary>], iteration_bounds = array<i64: 1, 1>, scalar_prefetch = 0 : i64, scratch_operands = 1 : i64, tpu.core_type = #tpu.core_type<tc>, window_params = [{transform_indices = @transform_0, window_bounds = array<i64: 8, 16>}, {transform_indices = @transform_1, window_bounds = array<i64: 8, 1>}, {transform_indices = @transform_2, window_bounds = array<i64: 1, 128>}]} {
    %c0_i32 = arith.constant 0 : i32
    %0 = arith.cmpi eq, %arg1, %c0_i32 : i32
    %1 = arith.extui %0 : i1 to i32
    %c0_i32_0 = arith.constant 0 : i32
    %2 = arith.cmpi ne, %1, %c0_i32_0 : i32
    scf.if %2 {
      %cst_17 = arith.constant 0.000000e+00 : f32
      %43 = vector.broadcast %cst_17 : f32 to vector<1x1xf32>
      %c0_18 = arith.constant 0 : index
      %c0_19 = arith.constant 0 : index
      %44 = vector.load %arg5[%c0_18, %c0_19] : memref<1x1xf32, #tpu.memory_space<vmem>>, vector<1x1xf32>
      tpu.vector_store %arg5[%c0_18, %c0_19], %43 {strides = array<i32>} : memref<1x1xf32, #tpu.memory_space<vmem>>, vector<1x1xf32>,
    } else {
    }
    %c0 = arith.constant 0 : index
    %c0_1 = arith.constant 0 : index
    %3 = vector.load %arg2[%c0, %c0_1] : memref<8x16xf32, #tpu.memory_space<vmem>>, vector<8x16xf32>
    %c0_2 = arith.constant 0 : index
    %c0_3 = arith.constant 0 : index
    %4 = vector.load %arg3[%c0_2, %c0_3] : memref<8x1xi32, #tpu.memory_space<vmem>>, vector<8x1xi32>
    %5 = tpu.iota {dimensions = array<i32: 1>} : vector<8x16xi32>
    %6 = vector.broadcast %4 : vector<8x1xi32> to vector<8x16xi32>
    %7 = arith.cmpi eq, %5, %6 : vector<8x16xi32>
    %cst = arith.constant 0.000000e+00 : f32
    %8 = vector.broadcast %cst : f32 to vector<8x16xf32>
    %9 = arith.select %7, %3, %8 : vector<8x16xi1>, vector<8x16xf32>
    %cst_4 = arith.constant dense<0.000000e+00> : vector<8xf32>
    %10 = vector.multi_reduction <add>, %9, %cst_4 [1] : vector<8x16xf32> to vector<8xf32>
    %11 = vector.shape_cast %10 : vector<8xf32> to vector<8x1xf32>
    %cst_5 = arith.constant 0.000000e+00 : f32
    %12 = vector.broadcast %cst_5 : f32 to vector<8x1xf32>
    %13 = arith.subf %12, %11 : vector<8x1xf32>
    %14 = math.exp %13 : vector<8x1xf32>
    %cst_6 = arith.constant 1.000000e+00 : f32
    %15 = vector.broadcast %cst_6 : f32 to vector<8x1xf32>
    %16 = arith.addf %15, %14 : vector<8x1xf32>
    %17 = tpu.reciprocal %16 : vector<8x1xf32> -> vector<8x1xf32>
    %cst_7 = arith.constant 1.000000e+00 : f32
    %18 = vector.broadcast %cst_7 : f32 to vector<8x1xf32>
    %19 = arith.subf %18, %17 : vector<8x1xf32>
    %20 = arith.mulf %19, %19 : vector<8x1xf32>
    %cst_8 = arith.constant dense<0xFF800000> : vector<8xf32>
    %21 = vector.multi_reduction <maximumf>, %3, %cst_8 [1] : vector<8x16xf32> to vector<8xf32>
    %22 = vector.shape_cast %21 : vector<8xf32> to vector<8x1xf32>
    %23 = vector.broadcast %22 : vector<8x1xf32> to vector<8x16xf32>
    %24 = arith.subf %3, %23 : vector<8x16xf32>
    %25 = math.exp %24 : vector<8x16xf32>
    %cst_9 = arith.constant dense<0.000000e+00> : vector<8xf32>
    %26 = vector.multi_reduction <add>, %25, %cst_9 [1] : vector<8x16xf32> to vector<8xf32>
    %27 = vector.shape_cast %26 : vector<8xf32> to vector<8x1xf32>
    %28 = math.log %27 : vector<8x1xf32>
    %29 = arith.addf %22, %28 : vector<8x1xf32>
    %30 = arith.subf %29, %11 : vector<8x1xf32>
    %31 = arith.mulf %20, %30 : vector<8x1xf32>
    %c0_10 = arith.constant 0 : index
    %c0_11 = arith.constant 0 : index
    %32 = vector.load %arg5[%c0_10, %c0_11] : memref<1x1xf32, #tpu.memory_space<vmem>>, vector<1x1xf32>
    %33 = vector.shape_cast %31 : vector<8x1xf32> to vector<1x8x1xf32>
    %cst_12 = arith.constant dense<0.000000e+00> : vector<1xf32>
    %34 = vector.multi_reduction <add>, %33, %cst_12 [1, 2] : vector<1x8x1xf32> to vector<1xf32>
    %35 = vector.shape_cast %34 : vector<1xf32> to vector<1x1x1xf32>
    %36 = vector.extract %35[0, 0, 0] : f32 from vector<1x1x1xf32>
    %37 = vector.broadcast %36 : f32 to vector<1x1xf32>
    %38 = arith.addf %32, %37 : vector<1x1xf32>
    %c0_13 = arith.constant 0 : index
    %c0_14 = arith.constant 0 : index
    %39 = vector.load %arg5[%c0_13, %c0_14] : memref<1x1xf32, #tpu.memory_space<vmem>>, vector<1x1xf32>
    tpu.vector_store %arg5[%c0_13, %c0_14], %38 {strides = array<i32>} : memref<1x1xf32, #tpu.memory_space<vmem>>, vector<1x1xf32>,
    %c0_i32_15 = arith.constant 0 : i32
    %40 = arith.cmpi eq, %arg1, %c0_i32_15 : i32
    %41 = arith.extui %40 : i1 to i32
    %c0_i32_16 = arith.constant 0 : i32
    %42 = arith.cmpi ne, %41, %c0_i32_16 : i32
    scf.if %42 {
      %c0_17 = arith.constant 0 : index
      %c0_18 = arith.constant 0 : index
      %43 = vector.load %arg5[%c0_17, %c0_18] : memref<1x1xf32, #tpu.memory_space<vmem>>, vector<1x1xf32>
      %44 = vector.shape_cast %43 : vector<1x1xf32> to vector<1x1xf32>
      %45 = vector.broadcast %44 : vector<1x1xf32> to vector<1x128xf32>
      %c0_19 = arith.constant 0 : index
      %c0_20 = arith.constant 0 : index
      %46 = vector.load %arg4[%c0_19, %c0_20] : memref<1x128xf32, #tpu.memory_space<vmem>>, vector<1x128xf32>
      tpu.vector_store %arg4[%c0_19, %c0_20], %45 {strides = array<i32>} : memref<1x128xf32, #tpu.memory_space<vmem>>, vector<1x128xf32>,
    } else {
    }
    return
  }
  func.func @transform_0(%arg0: i32, %arg1: i32) -> (i32, i32) {
    %c1_i32 = arith.constant 1 : i32
    %0 = arith.muli %arg0, %c1_i32 : i32
    %1 = arith.addi %0, %arg1 : i32
    %c0_i32 = arith.constant 0 : i32
    %c0_i32_0 = arith.constant 0 : i32
    return %1, %c0_i32 : i32, i32
  }
  func.func @transform_1(%arg0: i32, %arg1: i32) -> (i32, i32) {
    %c1_i32 = arith.constant 1 : i32
    %0 = arith.muli %arg0, %c1_i32 : i32
    %1 = arith.addi %0, %arg1 : i32
    %c0_i32 = arith.constant 0 : i32
    %c0_i32_0 = arith.constant 0 : i32
    return %1, %c0_i32 : i32, i32
  }
  func.func @transform_2(%arg0: i32, %arg1: i32) -> (i32, i32) {
    %c0_i32 = arith.constant 0 : i32
    %c0_i32_0 = arith.constant 0 : i32
    return %c0_i32, %arg0 : i32, i32
  }
}

</mosaic_0001>

<llo_original>
// kernel: tpu_custom_call.1
$region0: #{tpu_custom_call.1}
  #allocation0 [shape = 'u32[]', space=smem, size = 0x4, offset = 0x4, fixed_abs, tag = 'smem constant byte address 0x4 - core index']
  #allocation1 [shape = 'u32[144,128]{1,0:T(1,128)}', space=vmem, size = 0x12000, scoped, tag = 'internal scratch']
  #allocation2 [shape = 'f32[1,1]{1,0:T(1,128)}', space=vmem, size = 0x200, scoped, tag = 'scratch operand']
  %s0 = inlined_call_operand.vmem [shape: f32[8,16], index: 0, kind: input, shape index: {}]
  %s1 = inlined_call_operand.vmem [shape: s32[8,1], index: 1, kind: input, shape index: {}]
  %s2 = inlined_call_operand.hbm [shape: f32[1,128], index: 2, kind: output, shape index: {}]
  %s3 = sld [smem:[#allocation0]]
  $region26: #{tpu_custom_call.1} parent=0
    _
  %s5 = ssub.s32 1, %s3
  %s6 = scalar_select 0, %s5, %s3
  $region1: #{tpu_custom_call.1} parent=0
    #allocation3 [shape = 'u8[512]{0}', space=vmem, size = 0x400, scoped, tag = 'output window, operand 0, single buffered']
    #allocation4 [shape = 's32[1]{0}', space=sflag, size = 0x4, scoped, tag = 'scoped memory for tpu_custom_call.1']
    %7 = vsyncpa [#allocation4], 0
    // Predicated region
    $region2: #{tpu_custom_call.1} parent=1 // pred_check
      _
    $region3: #{tpu_custom_call.1} parent=1 // pred_check_branch
      %9 = sbr.rel (0) target = $region5
    $region4: #{tpu_custom_call.1} parent=1 // pred_region
      %s10 = sadd.s32 0, 0
      %p11 = scmp.lt.s32.totalorder %s10, 0
      %s12 = scalar_select %p11, %s10, 0
      %s13 = smul.addr %s12, 8
      %s14 = scalar_lea.vmem %s0, %s13
      %s15 = sadd.s32 0, 0
    $region5: #{tpu_custom_call.1} parent=1 // pred_fallthru
      _
    // Predicated region
    $region6: #{tpu_custom_call.1} parent=1 // pred_check
      _
    $region7: #{tpu_custom_call.1} parent=1 // pred_check_branch
      %17 = sbr.rel (0) target = $region9
    $region8: #{tpu_custom_call.1} parent=1 // pred_region
      %s18 = sadd.s32 0, 0
      %p19 = scmp.lt.s32.totalorder %s18, 0
      %s20 = scalar_select %p19, %s18, 0
      %s21 = smul.addr %s20, 8
      %s22 = scalar_lea.vmem %s1, %s21
      %s23 = sadd.s32 0, 0
    $region9: #{tpu_custom_call.1} parent=1 // pred_fallthru
      _
    %s24 = sadd.s32 0, 0
    %p25 = scmp.lt.s32.totalorder %s24, 0
    %s26 = scalar_select %p25, %s24, 0
    %s27 = smul.addr %s26, 8
    %s28 = scalar_lea.vmem %s0, %s27
    %s29 = sadd.s32 0, 0
    %p30 = scmp.lt.s32.totalorder %s29, 0
    %s31 = scalar_select %p30, %s29, 0
    %s32 = smul.addr %s31, 8
    %s33 = scalar_lea.vmem %s1, %s32
    %s34 = sadd.s32 0, 0
    %p35 = scmp.lt.s32.totalorder %s34, 0
    %s36 = scalar_select %p35, %s34, 0
    %s37 = smul.addr %s36, 8
    %s38 = scalar_lea.vmem %s0, %s37
    %s39 = sadd.s32 0, 0
    %s40 = sadd.s32 0, 0
    %p41 = scmp.lt.s32.totalorder %s40, 0
    %s42 = scalar_select %p41, %s40, 0
    %s43 = smul.addr %s42, 8
    %s44 = scalar_lea.vmem %s1, %s43
    %s45 = sadd.s32 0, 0
    %p46 = scmp.eq.s32.totalorder 0, 0
    // Predicated region
    $region10: #{tpu_custom_call.1} parent=1 // pred_check
      %p47 = pneg %p46
    $region11: #{tpu_custom_call.1} parent=1 // pred_check_branch
      %49 = sbr.rel (%p47) target = $region13
    $region12: #{tpu_custom_call.1} parent=1 // pred_region
      %vm50 = vcmask 0
      %51 = vst.msk [vmem:[#allocation2] sm:$0x1] %vm50, 0.0
    $region13: #{tpu_custom_call.1} parent=1 // pred_fallthru
      _
    %v52 = vld [vmem:[%s38] sm:$0xff]
    %v53 = vld [vmem:[%s44] sm:$0xff]
    %v54 = vlaneseq
    %v55 = vand.u32 %v54, 127
    %56 = vset.pattern.permute.xlu0 0
    %57 = vperm.xlu0 %56, %v53
    %v58 = vpop.permute.xlu0 %57
    %vm59 = vcmp.eq.s32.totalorder %v55, %v58
    %v60 = vsel %vm59, %v52, 0.0
    %vm61 = vcmask 130048
    %v62 = vsel %vm61, %v60, 0.0
    %63 = vadd.xlane.f32.xlu0 %v62
    %v64 = vpop.xlane.xlu0 %63
    %v65 = vsub.f32 0.0, %v64
    %v66 = vmul.f32 %v65, 1.442695
    %v67 = vpow.pop %v66
    %v68 = vadd.f32 %v67, 1.0
    %v69 = vrcp.pop %v68
    %v70 = vsub.f32 1.0, %v69
    %v71 = vmul.f32 %v70, %v70
    %v72 = vsel %vm61, %v52, -inf
    %73 = vmax.xlane.f32.xlu0 %v72
    %v74 = vpop.xlane.xlu0 %73
    %v75 = vsub.f32 %v52, %v74
    %v76 = vmul.f32 %v75, 1.442695
    %v77 = vpow.pop %v76
    %v78 = vsel %vm61, %v77, 0.0
    %79 = vadd.xlane.f32.xlu0 %v78
    %v80 = vpop.xlane.xlu0 %79
    %v81 = vlog2.pop %v80
    %v82 = vmul.f32 %v81, 0.6931472
    %v83 = vadd.f32 %v74, %v82
    %v84 = vsub.f32 %v83, %v64
    %v85 = vmul.f32 %v71, %v84
    %v86 = vld [vmem:[#allocation2] sm:$0x1]
    %vm87 = vcmask 7168
    %v88 = vsel %vm87, %v85, 0.0
    %89 = vadd.xlane.f32.xlu0 %v88
    %v90 = vpop.xlane.xlu0 %89
    %v91 = vrot.slane %v90, 4
    %v92 = vadd.f32 %v90, %v91
    %v93 = vrot.slane %v92, 2
    %v94 = vadd.f32 %v92, %v93
    %v95 = vrot.slane %v94, 1
    %v96 = vadd.f32 %v94, %v95
    %s97 = vtos %v96
    %v98 = vstv %s97
    %v99 = vadd.f32 %v86, %v98
    %vm100 = vcmask 0
    %101 = vst.msk [vmem:[#allocation2] sm:$0x1] %vm100, %v99
    // Predicated region
    $region14: #{tpu_custom_call.1} parent=1 // pred_check
      %p102 = pneg %p46
    $region15: #{tpu_custom_call.1} parent=1 // pred_check_branch
      %104 = sbr.rel (%p102) target = $region17
    $region16: #{tpu_custom_call.1} parent=1 // pred_region
      %v105 = vld [vmem:[#allocation2] sm:$0x1]
      %107 = vset.pattern.permute.xlu0 0
      %108 = vperm.xlu0 %107, %v105
      %v109 = vpop.permute.xlu0 %108
      %v111 = vlaneseq
      %v112 = vshrl.u32 %v111, 7
      %v113 = vsub.s32 0, %v112
      %v114 = vrot.slane %v109, %v113
      %115 = vst [vmem:[#allocation3] sm:$0x1] %v114
    $region17: #{tpu_custom_call.1} parent=1 // pred_fallthru
      _
    // Predicated region
    $region18: #{tpu_custom_call.1} parent=1 // pred_check
      _
    $region19: #{tpu_custom_call.1} parent=1 // pred_check_branch
      %117 = sbr.rel (0) target = $region21
    $region20: #{tpu_custom_call.1} parent=1 // pred_region
      %s119 = ssub.s32 16, 16
      %120 = vsyncadd [#allocation4], %s119
      %s122 = sshll.u32 [#allocation3], 4
      %s123 = int_to_ptr.vmem [resolvable:$true] %s122
      %125 = dma.vmem_to_hbm [thread:$0]  %s123, 16, %s2, [#allocation4]
    $region21: #{tpu_custom_call.1} parent=1 // pred_fallthru
      _
    // Predicated region
    $region22: #{tpu_custom_call.1} parent=1 // pred_check
      _
    $region23: #{tpu_custom_call.1} parent=1 // pred_check_branch
      %127 = sbr.rel (0) target = $region25
    $region24: #{tpu_custom_call.1} parent=1 // pred_region
      %128 = dma.done [#allocation4], 16
    $region25: #{tpu_custom_call.1} parent=1 // pred_fallthru
      _
    %129 = vsyncpa [#allocation4], 1

</llo_original>
